<compile_context>
chip_gen: v5e
topology: v5e:2x2
jax: 0.10.0
libtpu: 0.0.40
codegen_flags: <defaults>
</compile_context>

<pallas_src>
import jax
import jax.numpy as jnp
import numpy as np
from jax.experimental import pallas as pl
from jax.experimental.pallas import tpu as pltpu


# ----------------------------- Pallas kernel ------------------------------- #
def _fused_head_kernel(x_ref, e_ref, m_ref, wo_ref, we_ref, b_ref, o_ref):
    # x_ref : (TM, H)    LM hidden-state tile (unmasked)
    # e_ref : (TM, E)    POS-tag embedding tile
    # m_ref : (TM, 1)    attention-mask column
    # wo_ref: (H, Lp)    out_layer weight, zero-padded to Lp lanes
    # we_ref: (E, Lp)    trans_layer folded through out_layer (Wt @ Wo), padded
    # b_ref : (1, Lp)    combined bias (bt @ Wo + bo), padded
    # o_ref : (TM, Lp)   lane-dense logits tile
    xm = x_ref[...] * m_ref[...]                       # mask fold (free VPU op)
    acc = jnp.dot(xm, wo_ref[...], preferred_element_type=jnp.float32)
    acc = acc + jnp.dot(e_ref[...], we_ref[...], preferred_element_type=jnp.float32)
    o_ref[...] = (acc + b_ref[...]).astype(o_ref.dtype)


def lan_model_graph_head(xs_hidden, y_emb, x_mask, w_trans, b_trans, w_out, b_out,
                         *, tm=128, lane=128):
    """Fused: out_layer(mask*xs_hidden + trans_layer(y_emb)).

    xs_hidden: (N, H) float32   (N = B*S, unmasked LM states)
    y_emb    : (N, E) float32
    x_mask   : (N,)   float32
    w_trans  : (E, H), b_trans: (H,)
    w_out    : (H, L), b_out  : (L,)
    returns  : (N, L) float32
    """
    N, H = xs_hidden.shape
    E = y_emb.shape[1]
    L = w_out.shape[1]

    # Pad rows to a multiple of the row tile and logits to lane-dense width.
    N_pad = pl.cdiv(N, tm) * tm
    L_pad = pl.cdiv(L, lane) * lane

    def pad_rows(a):
        return jnp.pad(a, ((0, N_pad - N), (0, 0))) if N_pad != N else a

    x_p = pad_rows(xs_hidden.astype(jnp.float32))
    e_p = pad_rows(y_emb.astype(jnp.float32))
    m_p = pad_rows(x_mask.reshape(N, 1).astype(jnp.float32))

    # Algebraic fusion of the two GEMMs (precomputed once, tiny):
    #   (x*m + e@Wt + bt) @ Wo + bo  ==  (x*m)@Wo + e@(Wt@Wo) + (bt@Wo + bo)
    w_out_pad = jnp.pad(w_out.astype(jnp.float32), ((0, 0), (0, L_pad - L)))
    w_te_pad = jnp.pad((w_trans @ w_out).astype(jnp.float32), ((0, 0), (0, L_pad - L)))
    b_comb = jnp.pad((b_trans @ w_out + b_out).astype(jnp.float32),
                     (0, L_pad - L)).reshape(1, L_pad)

    grid = (N_pad // tm,)
    out = pl.pallas_call(
        _fused_head_kernel,
        out_shape=jax.ShapeDtypeStruct((N_pad, L_pad), jnp.float32),
        grid_spec=pltpu.PrefetchScalarGridSpec(
            num_scalar_prefetch=0,
            grid=grid,
            in_specs=[
                pl.BlockSpec((tm, H), lambda i: (i, 0)),       # xs_hidden tile
                pl.BlockSpec((tm, E), lambda i: (i, 0)),       # y_emb tile
                pl.BlockSpec((tm, 1), lambda i: (i, 0)),       # mask column
                pl.BlockSpec((H, L_pad), lambda i: (0, 0)),    # Wo (resident)
                pl.BlockSpec((E, L_pad), lambda i: (0, 0)),    # Wt@Wo (resident)
                pl.BlockSpec((1, L_pad), lambda i: (0, 0)),    # combined bias
            ],
            out_specs=pl.BlockSpec((tm, L_pad), lambda i: (i, 0)),
        ),
        compiler_params=pltpu.CompilerParams(
            dimension_semantics=("parallel",),   # shardable across TCs for large N
        ),
    )(x_p, e_p, m_p, w_out_pad, w_te_pad, b_comb)

    return out[:N, :L]


# ------------------------------ Module wrapper ------------------------------ #
class LanModelGraphPallas:
    """JAX/Pallas port of LanModelGraph with use_pos='add'."""

    def __init__(self, key, vocab_size=100, tag_size=10,
                 lan_hidden_size=32, embedding_size=16, num_labels=8):
        k = jax.random.split(key, 6)
        s = 0.02
        # stand-in "lan_layer": deterministic word embedding table (see TODO above)
        self.word_emb = s * jax.random.normal(k[0], (vocab_size, lan_hidden_size), jnp.float32)
        # nn.Embedding(tag_size, embedding_size)
        self.pos_emb = s * jax.random.normal(k[1], (tag_size, embedding_size), jnp.float32)
        # nn.Linear(embedding_size, lan_hidden_size)  -> stored transposed (E, H)
        self.w_trans = s * jax.random.normal(k[2], (embedding_size, lan_hidden_size), jnp.float32)
        self.b_trans = s * jax.random.normal(k[3], (lan_hidden_size,), jnp.float32)
        # nn.Linear(lan_hidden_size, num_labels)      -> stored transposed (H, L)
        self.w_out = s * jax.random.normal(k[4], (lan_hidden_size, num_labels), jnp.float32)
        self.b_out = s * jax.random.normal(k[5], (num_labels,), jnp.float32)
        self.H = lan_hidden_size
        self.E = embedding_size
        self.L = num_labels

    def __call__(self, xs, x_masks, y_tags):
        # xs: (B, S) int32 token ids; x_masks: (B, S) float32; y_tags: (B, S) int32
        B, S = xs.shape
        # step 1 stand-in for pretrained LM: embedding lookup (mask folded in kernel)
        xs_hidden = jnp.take(self.word_emb, xs, axis=0)        # (B,S,H)
        # step 2: POS tag embedding
        y_emb = jnp.take(self.pos_emb, y_tags, axis=0)          # (B,S,E)
        # steps (mask) + 3-5 fused in Pallas
        out = lan_model_graph_head(
            xs_hidden.reshape(B * S, self.H),
            y_emb.reshape(B * S, self.E),
            x_masks.reshape(B * S).astype(jnp.float32),
            self.w_trans, self.b_trans, self.w_out, self.b_out,
            tm=128,
        )
        return out.reshape(B, S, self.L)

    # pure-JAX reference for verification
    def reference(self, xs, x_masks, y_tags):
        xs_hidden = jnp.take(self.word_emb, xs, axis=0) * x_masks[..., None]
        y_emb = jnp.take(self.pos_emb, y_tags, axis=0)
        y_emb = y_emb @ self.w_trans + self.b_trans
        h = xs_hidden + y_emb
        return h @ self.w_out + self.b_out


# ---------------------------------- main ------------------------------------ #
if __name__ == "__main__":
    B, S = 2, 8
    vocab_size, tag_size = 100, 10
    lan_hidden, emb_size, num_labels = 32, 16, 8

    key = jax.random.PRNGKey(0)
    k_model, k_xs, k_tags, k_mask = jax.random.split(key, 4)

    model = LanModelGraphPallas(
        k_model, vocab_size=vocab_size, tag_size=tag_size,
        lan_hidden_size=lan_hidden, embedding_size=emb_size, num_labels=num_labels,
    )

    xs = jax.random.randint(k_xs, (B, S), 0, vocab_size, dtype=jnp.int32)
    y_tags = jax.random.randint(k_tags, (B, S), 0, tag_size, dtype=jnp.int32)
    # attention mask: first few tokens valid per row
    x_masks = (jnp.arange(S)[None, :] < jnp.array([[S], [S - 2]])).astype(jnp.float32)

    ys = model(xs, x_masks, y_tags)
    ys = jax.block_until_ready(ys)

    ys_ref = model.reference(xs, x_masks, y_tags)
    np.testing.assert_allclose(np.asarray(ys), np.asarray(ys_ref), rtol=1e-5, atol=1e-5)

    assert ys.shape == (B, S, num_labels)
    print("KERNEL_OK")
</pallas_src>

<mosaic_0001>
module attributes {stable_mosaic.version = 11 : i64} {
  func.func @_fused_head_kernel(%arg0: i32, %arg1: memref<128x32xf32, #tpu.memory_space<vmem>>, %arg2: memref<128x16xf32, #tpu.memory_space<vmem>>, %arg3: memref<128x1xf32, #tpu.memory_space<vmem>>, %arg4: memref<32x128xf32, #tpu.memory_space<vmem>>, %arg5: memref<16x128xf32, #tpu.memory_space<vmem>>, %arg6: memref<1x128xf32, #tpu.memory_space<vmem>>, %arg7: memref<128x128xf32, #tpu.memory_space<vmem>>) attributes {dimension_semantics = [#tpu.dimension_semantics<parallel>], iteration_bounds = array<i64: 1>, scalar_prefetch = 0 : i64, scratch_operands = 0 : i64, tpu.core_type = #tpu.core_type<tc>, window_params = [{transform_indices = @transform_0, window_bounds = array<i64: 128, 32>}, {transform_indices = @transform_1, window_bounds = array<i64: 128, 16>}, {transform_indices = @transform_2, window_bounds = array<i64: 128, 1>}, {pipeline_mode = #tpu.pipeline_mode<synchronous>, transform_indices = @transform_3, window_bounds = array<i64: 32, 128>}, {pipeline_mode = #tpu.pipeline_mode<synchronous>, transform_indices = @transform_4, window_bounds = array<i64: 16, 128>}, {pipeline_mode = #tpu.pipeline_mode<synchronous>, transform_indices = @transform_5, window_bounds = array<i64: 1, 128>}, {transform_indices = @transform_6, window_bounds = array<i64: 128, 128>}]} {
    %c0 = arith.constant 0 : index
    %c0_0 = arith.constant 0 : index
    %0 = vector.load %arg1[%c0, %c0_0] : memref<128x32xf32, #tpu.memory_space<vmem>>, vector<128x32xf32>
    %c0_1 = arith.constant 0 : index
    %c0_2 = arith.constant 0 : index
    %1 = vector.load %arg3[%c0_1, %c0_2] : memref<128x1xf32, #tpu.memory_space<vmem>>, vector<128x1xf32>
    %2 = vector.broadcast %1 : vector<128x1xf32> to vector<128x32xf32>
    %3 = arith.mulf %0, %2 : vector<128x32xf32>
    %c0_3 = arith.constant 0 : index
    %c0_4 = arith.constant 0 : index
    %4 = vector.load %arg4[%c0_3, %c0_4] : memref<32x128xf32, #tpu.memory_space<vmem>>, vector<32x128xf32>
    %cst = arith.constant dense<0.000000e+00> : vector<128x128xf32>
    %5 = tpu.matmul %3, %4, %cst {dimension_numbers = #tpu.dot_dimension_numbers<[1], [0], [0], [1], [0, 0, 1, 1], [], []>} : vector<128x32xf32>, vector<32x128xf32>, vector<128x128xf32> -> vector<128x128xf32>
    %c0_5 = arith.constant 0 : index
    %c0_6 = arith.constant 0 : index
    %6 = vector.load %arg2[%c0_5, %c0_6] : memref<128x16xf32, #tpu.memory_space<vmem>>, vector<128x16xf32>
    %c0_7 = arith.constant 0 : index
    %c0_8 = arith.constant 0 : index
    %7 = vector.load %arg5[%c0_7, %c0_8] : memref<16x128xf32, #tpu.memory_space<vmem>>, vector<16x128xf32>
    %cst_9 = arith.constant dense<0.000000e+00> : vector<128x128xf32>
    %8 = tpu.matmul %6, %7, %cst_9 {dimension_numbers = #tpu.dot_dimension_numbers<[1], [0], [0], [1], [0, 0, 1, 1], [], []>} : vector<128x16xf32>, vector<16x128xf32>, vector<128x128xf32> -> vector<128x128xf32>
    %9 = arith.addf %5, %8 : vector<128x128xf32>
    %c0_10 = arith.constant 0 : index
    %c0_11 = arith.constant 0 : index
    %10 = vector.load %arg6[%c0_10, %c0_11] : memref<1x128xf32, #tpu.memory_space<vmem>>, vector<1x128xf32>
    %11 = vector.broadcast %10 : vector<1x128xf32> to vector<128x128xf32>
    %12 = arith.addf %9, %11 : vector<128x128xf32>
    %c0_12 = arith.constant 0 : index
    %c0_13 = arith.constant 0 : index
    %13 = vector.load %arg7[%c0_12, %c0_13] : memref<128x128xf32, #tpu.memory_space<vmem>>, vector<128x128xf32>
    tpu.vector_store %arg7[%c0_12, %c0_13], %12 {strides = array<i32>} : memref<128x128xf32, #tpu.memory_space<vmem>>, vector<128x128xf32>,
    return
  }
  func.func @transform_0(%arg0: i32) -> (i32, i32) {
    %c0_i32 = arith.constant 0 : i32
    %c0_i32_0 = arith.constant 0 : i32
    return %arg0, %c0_i32 : i32, i32
  }
  func.func @transform_1(%arg0: i32) -> (i32, i32) {
    %c0_i32 = arith.constant 0 : i32
    %c0_i32_0 = arith.constant 0 : i32
    return %arg0, %c0_i32 : i32, i32
  }
  func.func @transform_2(%arg0: i32) -> (i32, i32) {
    %c0_i32 = arith.constant 0 : i32
    %c0_i32_0 = arith.constant 0 : i32
    return %arg0, %c0_i32 : i32, i32
  }
  func.func @transform_3(%arg0: i32) -> (i32, i32) {
    %c0_i32 = arith.constant 0 : i32
    %c0_i32_0 = arith.constant 0 : i32
    %c0_i32_1 = arith.constant 0 : i32
    return %c0_i32, %c0_i32_0 : i32, i32
  }
  func.func @transform_4(%arg0: i32) -> (i32, i32) {
    %c0_i32 = arith.constant 0 : i32
    %c0_i32_0 = arith.constant 0 : i32
    %c0_i32_1 = arith.constant 0 : i32
    return %c0_i32, %c0_i32_0 : i32, i32
  }
  func.func @transform_5(%arg0: i32) -> (i32, i32) {
    %c0_i32 = arith.constant 0 : i32
    %c0_i32_0 = arith.constant 0 : i32
    %c0_i32_1 = arith.constant 0 : i32
    return %c0_i32, %c0_i32_0 : i32, i32
  }
  func.func @transform_6(%arg0: i32) -> (i32, i32) {
    %c0_i32 = arith.constant 0 : i32
    %c0_i32_0 = arith.constant 0 : i32
    return %arg0, %c0_i32 : i32, i32
  }
}

</mosaic_0001>

<llo_original>
// kernel: tpu_custom_call.1
$region0: #{tpu_custom_call.1}
  #allocation0 [shape = 'u32[]', space=smem, size = 0x4, offset = 0x4, fixed_abs, tag = 'smem constant byte address 0x4 - core index']
  #allocation1 [shape = 'u32[72,128]{1,0:T(1,128)}', space=vmem, size = 0x9000, scoped, tag = 'internal scratch']
  %s0 = inlined_call_operand.vmem [shape: f32[128,32], index: 0, kind: input, shape index: {}]
  %s1 = inlined_call_operand.vmem [shape: f32[128,16], index: 1, kind: input, shape index: {}]
  %s2 = inlined_call_operand.vmem [shape: f32[128,1], index: 2, kind: input, shape index: {}]
  %s3 = inlined_call_operand.vmem [shape: f32[32,128], index: 3, kind: input, shape index: {}]
  %s4 = inlined_call_operand.vmem [shape: f32[16,128], index: 4, kind: input, shape index: {}]
  %s5 = inlined_call_operand.vmem [shape: f32[1,128], index: 5, kind: input, shape index: {}]
  %s6 = inlined_call_operand.hbm [shape: f32[128,128], index: 6, kind: output, shape index: {}]
  %s7 = sld [smem:[#allocation0]]
  $region34: #{tpu_custom_call.1} parent=0
    _
  %s9 = ssub.s32 1, %s7
  %s10 = scalar_select 0, %s9, %s7
  $region1: #{tpu_custom_call.1} parent=0
    #allocation2 [shape = 'u8[65536]{0}', space=vmem, size = 0x10000, scoped, tag = 'output window, operand 0, single buffered']
    #allocation3 [shape = 's32[1]{0}', space=sflag, size = 0x4, scoped, tag = 'scoped memory for tpu_custom_call.1']
    %11 = vsyncpa [#allocation3], 0
    // Predicated region
    $region2: #{tpu_custom_call.1} parent=1 // pred_check
      _
    $region3: #{tpu_custom_call.1} parent=1 // pred_check_branch
      %13 = sbr.rel (0) target = $region5
    $region4: #{tpu_custom_call.1} parent=1 // pred_region
      _
    $region5: #{tpu_custom_call.1} parent=1 // pred_fallthru
      _
    // Predicated region
    $region6: #{tpu_custom_call.1} parent=1 // pred_check
      _
    $region7: #{tpu_custom_call.1} parent=1 // pred_check_branch
      %15 = sbr.rel (0) target = $region9
    $region8: #{tpu_custom_call.1} parent=1 // pred_region
      _
    $region9: #{tpu_custom_call.1} parent=1 // pred_fallthru
      _
    // Predicated region
    $region10: #{tpu_custom_call.1} parent=1 // pred_check
      _
    $region11: #{tpu_custom_call.1} parent=1 // pred_check_branch
      %17 = sbr.rel (0) target = $region13
    $region12: #{tpu_custom_call.1} parent=1 // pred_region
      _
    $region13: #{tpu_custom_call.1} parent=1 // pred_fallthru
      _
    // Predicated region
    $region14: #{tpu_custom_call.1} parent=1 // pred_check
      _
    $region15: #{tpu_custom_call.1} parent=1 // pred_check_branch
      %19 = sbr.rel (0) target = $region17
    $region16: #{tpu_custom_call.1} parent=1 // pred_region
      _
    $region17: #{tpu_custom_call.1} parent=1 // pred_fallthru
      _
    // Predicated region
    $region18: #{tpu_custom_call.1} parent=1 // pred_check
      _
    $region19: #{tpu_custom_call.1} parent=1 // pred_check_branch
      %21 = sbr.rel (0) target = $region21
    $region20: #{tpu_custom_call.1} parent=1 // pred_region
      _
    $region21: #{tpu_custom_call.1} parent=1 // pred_fallthru
      _
    // Predicated region
    $region22: #{tpu_custom_call.1} parent=1 // pred_check
      _
    $region23: #{tpu_custom_call.1} parent=1 // pred_check_branch
      %23 = sbr.rel (0) target = $region25
    $region24: #{tpu_custom_call.1} parent=1 // pred_region
      _
    $region25: #{tpu_custom_call.1} parent=1 // pred_fallthru
      _
    %v24 = vld [vmem:[%s0] sm:$0xff]
    %v25 = vld [vmem:[%s0 + $0x8] sm:$0xff]
    %v26 = vld [vmem:[%s0 + $0x10] sm:$0xff]
    %v27 = vld [vmem:[%s0 + $0x18] sm:$0xff]
    %v28 = vld [vmem:[%s0 + $0x20] sm:$0xff]
    %v29 = vld [vmem:[%s0 + $0x28] sm:$0xff]
    %v30 = vld [vmem:[%s0 + $0x30] sm:$0xff]
    %v31 = vld [vmem:[%s0 + $0x38] sm:$0xff]
    %v32 = vld [vmem:[%s0 + $0x40] sm:$0xff]
    %v33 = vld [vmem:[%s0 + $0x48] sm:$0xff]
    %v34 = vld [vmem:[%s0 + $0x50] sm:$0xff]
    %v35 = vld [vmem:[%s0 + $0x58] sm:$0xff]
    %v36 = vld [vmem:[%s0 + $0x60] sm:$0xff]
    %v37 = vld [vmem:[%s0 + $0x68] sm:$0xff]
    %v38 = vld [vmem:[%s0 + $0x70] sm:$0xff]
    %v39 = vld [vmem:[%s0 + $0x78] sm:$0xff]
    %v40 = vld [vmem:[%s2] sm:$0xff]
    %v41 = vld [vmem:[%s2 + $0x8] sm:$0xff]
    %v42 = vld [vmem:[%s2 + $0x10] sm:$0xff]
    %v43 = vld [vmem:[%s2 + $0x18] sm:$0xff]
    %v44 = vld [vmem:[%s2 + $0x20] sm:$0xff]
    %v45 = vld [vmem:[%s2 + $0x28] sm:$0xff]
    %v46 = vld [vmem:[%s2 + $0x30] sm:$0xff]
    %v47 = vld [vmem:[%s2 + $0x38] sm:$0xff]
    %v48 = vld [vmem:[%s2 + $0x40] sm:$0xff]
    %v49 = vld [vmem:[%s2 + $0x48] sm:$0xff]
    %v50 = vld [vmem:[%s2 + $0x50] sm:$0xff]
    %v51 = vld [vmem:[%s2 + $0x58] sm:$0xff]
    %v52 = vld [vmem:[%s2 + $0x60] sm:$0xff]
    %v53 = vld [vmem:[%s2 + $0x68] sm:$0xff]
    %v54 = vld [vmem:[%s2 + $0x70] sm:$0xff]
    %v55 = vld [vmem:[%s2 + $0x78] sm:$0xff]
    %57 = vset.pattern.permute.xlu0 0
    %58 = vperm.xlu0 %57, %v40
    %v59 = vpop.permute.xlu0 %58
    %62 = vset.pattern.permute.xlu0 0
    %63 = vperm.xlu0 %62, %v41
    %v64 = vpop.permute.xlu0 %63
    %67 = vset.pattern.permute.xlu0 0
    %68 = vperm.xlu0 %67, %v42
    %v69 = vpop.permute.xlu0 %68
    %72 = vset.pattern.permute.xlu0 0
    %73 = vperm.xlu0 %72, %v43
    %v74 = vpop.permute.xlu0 %73
    %77 = vset.pattern.permute.xlu0 0
    %78 = vperm.xlu0 %77, %v44
    %v79 = vpop.permute.xlu0 %78
    %82 = vset.pattern.permute.xlu0 0
    %83 = vperm.xlu0 %82, %v45
    %v84 = vpop.permute.xlu0 %83
    %87 = vset.pattern.permute.xlu0 0
    %88 = vperm.xlu0 %87, %v46
    %v89 = vpop.permute.xlu0 %88
    %92 = vset.pattern.permute.xlu0 0
    %93 = vperm.xlu0 %92, %v47
    %v94 = vpop.permute.xlu0 %93
    %97 = vset.pattern.permute.xlu0 0
    %98 = vperm.xlu0 %97, %v48
    %v99 = vpop.permute.xlu0 %98
    %102 = vset.pattern.permute.xlu0 0
    %103 = vperm.xlu0 %102, %v49
    %v104 = vpop.permute.xlu0 %103
    %107 = vset.pattern.permute.xlu0 0
    %108 = vperm.xlu0 %107, %v50
    %v109 = vpop.permute.xlu0 %108
    %112 = vset.pattern.permute.xlu0 0
    %113 = vperm.xlu0 %112, %v51
    %v114 = vpop.permute.xlu0 %113
    %117 = vset.pattern.permute.xlu0 0
    %118 = vperm.xlu0 %117, %v52
    %v119 = vpop.permute.xlu0 %118
    %122 = vset.pattern.permute.xlu0 0
    %123 = vperm.xlu0 %122, %v53
    %v124 = vpop.permute.xlu0 %123
    %127 = vset.pattern.permute.xlu0 0
    %128 = vperm.xlu0 %127, %v54
    %v129 = vpop.permute.xlu0 %128
    %132 = vset.pattern.permute.xlu0 0
    %133 = vperm.xlu0 %132, %v55
    %v134 = vpop.permute.xlu0 %133
    %v136 = vmul.f32 %v24, %v59
    %v137 = vmul.f32 %v25, %v64
    %v138 = vmul.f32 %v26, %v69
    %v139 = vmul.f32 %v27, %v74
    %v140 = vmul.f32 %v28, %v79
    %v141 = vmul.f32 %v29, %v84
    %v142 = vmul.f32 %v30, %v89
    %v143 = vmul.f32 %v31, %v94
    %v144 = vmul.f32 %v32, %v99
    %v145 = vmul.f32 %v33, %v104
    %v146 = vmul.f32 %v34, %v109
    %v147 = vmul.f32 %v35, %v114
    %v148 = vmul.f32 %v36, %v119
    %v149 = vmul.f32 %v37, %v124
    %v150 = vmul.f32 %v38, %v129
    %v151 = vmul.f32 %v39, %v134
    %v152 = vld [vmem:[%s3] sm:$0xff]
    %v153 = vld [vmem:[%s3 + $0x8] sm:$0xff]
    %v154 = vld [vmem:[%s3 + $0x10] sm:$0xff]
    %v155 = vld [vmem:[%s3 + $0x18] sm:$0xff]
    %v156 = vld [vmem:[%s1] sm:$0xff]
    %v157 = vld [vmem:[%s1 + $0x8] sm:$0xff]
    %v158 = vld [vmem:[%s1 + $0x10] sm:$0xff]
    %v159 = vld [vmem:[%s1 + $0x18] sm:$0xff]
    %v160 = vld [vmem:[%s1 + $0x20] sm:$0xff]
    %v161 = vld [vmem:[%s1 + $0x28] sm:$0xff]
    %v162 = vld [vmem:[%s1 + $0x30] sm:$0xff]
    %v163 = vld [vmem:[%s1 + $0x38] sm:$0xff]
    %v164 = vld [vmem:[%s1 + $0x40] sm:$0xff]
    %v165 = vld [vmem:[%s1 + $0x48] sm:$0xff]
    %v166 = vld [vmem:[%s1 + $0x50] sm:$0xff]
    %v167 = vld [vmem:[%s1 + $0x58] sm:$0xff]
    %v168 = vld [vmem:[%s1 + $0x60] sm:$0xff]
    %v169 = vld [vmem:[%s1 + $0x68] sm:$0xff]
    %v170 = vld [vmem:[%s1 + $0x70] sm:$0xff]
    %v171 = vld [vmem:[%s1 + $0x78] sm:$0xff]
    %v172 = vld [vmem:[%s4] sm:$0xff]
    %v173 = vld [vmem:[%s4 + $0x8] sm:$0xff]
    %vm174 = vcmask 130048
    %v176 = vsel %vm174, %v156, 0
    %v179 = vsel %vm174, %v157, 0
    %v182 = vsel %vm174, %v158, 0
    %v185 = vsel %vm174, %v159, 0
    %v188 = vsel %vm174, %v160, 0
    %v191 = vsel %vm174, %v161, 0
    %v194 = vsel %vm174, %v162, 0
    %v197 = vsel %vm174, %v163, 0
    %v200 = vsel %vm174, %v164, 0
    %v203 = vsel %vm174, %v165, 0
    %v206 = vsel %vm174, %v166, 0
    %v209 = vsel %vm174, %v167, 0
    %v212 = vsel %vm174, %v168, 0
    %v215 = vsel %vm174, %v169, 0
    %v218 = vsel %vm174, %v170, 0
    %v221 = vsel %vm174, %v171, 0
    %223 = vmatpush.msra.mxu0 0.0
    %224 = vmatpush.msra.mxu0 0.0
    %225 = vmatpush.msra.mxu0 0.0
    %226 = vmatpush.msra.mxu0 0.0
    %227 = vmatpush.msra.mxu0 0.0
    %228 = vmatpush.msra.mxu0 0.0
    %229 = vmatpush.msra.mxu0 0.0
    %230 = vmatpush.msra.mxu0 0.0
    %231 = vmatpush.msra.mxu0 0.0
    %232 = vmatpush.msra.mxu0 0.0
    %233 = vmatpush.msra.mxu0 0.0
    %234 = vmatpush.msra.mxu0 0.0
    %235 = vmatpush.msra.mxu0 0.0
    %236 = vmatpush.msra.mxu0 0.0
    %237 = vmatpush.msra.mxu0 %v173
    %238 = vmatpush.msra.mxu0 %v172
    %239 = vmatmul.f32.gmra.mxu0 %v176
    %v240 = vpop.f32.mrf.mxu0
    %v241 = vadd.f32 0.0, %v240
    %242 = vmatmul.f32.gmra.mxu0 %v179
    %v243 = vpop.f32.mrf.mxu0
    %v244 = vadd.f32 0.0, %v243
    %245 = vmatmul.f32.gmra.mxu0 %v182
    %v246 = vpop.f32.mrf.mxu0
    %v247 = vadd.f32 0.0, %v246
    %248 = vmatmul.f32.gmra.mxu0 %v185
    %v249 = vpop.f32.mrf.mxu0
    %v250 = vadd.f32 0.0, %v249
    %251 = vmatmul.f32.gmra.mxu0 %v188
    %v252 = vpop.f32.mrf.mxu0
    %v253 = vadd.f32 0.0, %v252
    %254 = vmatmul.f32.gmra.mxu0 %v191
    %v255 = vpop.f32.mrf.mxu0
    %v256 = vadd.f32 0.0, %v255
    %257 = vmatmul.f32.gmra.mxu0 %v194
    %v258 = vpop.f32.mrf.mxu0
    %v259 = vadd.f32 0.0, %v258
    %260 = vmatmul.f32.gmra.mxu0 %v197
    %v261 = vpop.f32.mrf.mxu0
    %v262 = vadd.f32 0.0, %v261
    %263 = vmatmul.f32.gmra.mxu0 %v200
    %v264 = vpop.f32.mrf.mxu0
    %v265 = vadd.f32 0.0, %v264
    %266 = vmatmul.f32.gmra.mxu0 %v203
    %v267 = vpop.f32.mrf.mxu0
    %v268 = vadd.f32 0.0, %v267
    %269 = vmatmul.f32.gmra.mxu0 %v206
    %v270 = vpop.f32.mrf.mxu0
    %v271 = vadd.f32 0.0, %v270
    %272 = vmatmul.f32.gmra.mxu0 %v209
    %v273 = vpop.f32.mrf.mxu0
    %v274 = vadd.f32 0.0, %v273
    %275 = vmatmul.f32.gmra.mxu0 %v212
    %v276 = vpop.f32.mrf.mxu0
    %v277 = vadd.f32 0.0, %v276
    %278 = vmatmul.f32.gmra.mxu0 %v215
    %v279 = vpop.f32.mrf.mxu0
    %v280 = vadd.f32 0.0, %v279
    %281 = vmatmul.f32.gmra.mxu0 %v218
    %v282 = vpop.f32.mrf.mxu0
    %v283 = vadd.f32 0.0, %v282
    %284 = vmatmul.f32.gmra.mxu0 %v221
    %v285 = vpop.f32.mrf.mxu0
    %v286 = vadd.f32 0.0, %v285
    %287 = vdwg.mxu0
    %vm288 = vcmask 261120
    %v290 = vsel %vm288, %v136, 0
    %v293 = vsel %vm288, %v137, 0
    %v296 = vsel %vm288, %v138, 0
    %v299 = vsel %vm288, %v139, 0
    %v302 = vsel %vm288, %v140, 0
    %v305 = vsel %vm288, %v141, 0
    %v308 = vsel %vm288, %v142, 0
    %v311 = vsel %vm288, %v143, 0
    %v314 = vsel %vm288, %v144, 0
    %v317 = vsel %vm288, %v145, 0
    %v320 = vsel %vm288, %v146, 0
    %v323 = vsel %vm288, %v147, 0
    %v326 = vsel %vm288, %v148, 0
    %v329 = vsel %vm288, %v149, 0
    %v332 = vsel %vm288, %v150, 0
    %v335 = vsel %vm288, %v151, 0
    %337 = vmatpush.msra.mxu0 0.0
    %338 = vmatpush.msra.mxu0 0.0
    %339 = vmatpush.msra.mxu0 0.0
    %340 = vmatpush.msra.mxu0 0.0
    %341 = vmatpush.msra.mxu0 0.0
    %342 = vmatpush.msra.mxu0 0.0
    %343 = vmatpush.msra.mxu0 0.0
    %344 = vmatpush.msra.mxu0 0.0
    %345 = vmatpush.msra.mxu0 0.0
    %346 = vmatpush.msra.mxu0 0.0
    %347 = vmatpush.msra.mxu0 0.0
    %348 = vmatpush.msra.mxu0 0.0
    %349 = vmatpush.msra.mxu0 %v155
    %350 = vmatpush.msra.mxu0 %v154
    %351 = vmatpush.msra.mxu0 %v153
    %352 = vmatpush.msra.mxu0 %v152
    %353 = vmatmul.f32.gmra.mxu0 %v290
    %v354 = vpop.f32.mrf.mxu0
    %v355 = vadd.f32 %v241, %v354
    %356 = vmatmul.f32.gmra.mxu0 %v293
    %v357 = vpop.f32.mrf.mxu0
    %v358 = vadd.f32 %v244, %v357
    %359 = vmatmul.f32.gmra.mxu0 %v296
    %v360 = vpop.f32.mrf.mxu0
    %v361 = vadd.f32 %v247, %v360
    %362 = vmatmul.f32.gmra.mxu0 %v299
    %v363 = vpop.f32.mrf.mxu0
    %v364 = vadd.f32 %v250, %v363
    %365 = vmatmul.f32.gmra.mxu0 %v302
    %v366 = vpop.f32.mrf.mxu0
    %v367 = vadd.f32 %v253, %v366
    %368 = vmatmul.f32.gmra.mxu0 %v305
    %v369 = vpop.f32.mrf.mxu0
    %v370 = vadd.f32 %v256, %v369
    %371 = vmatmul.f32.gmra.mxu0 %v308
    %v372 = vpop.f32.mrf.mxu0
    %v373 = vadd.f32 %v259, %v372
    %374 = vmatmul.f32.gmra.mxu0 %v311
    %v375 = vpop.f32.mrf.mxu0
    %v376 = vadd.f32 %v262, %v375
    %377 = vmatmul.f32.gmra.mxu0 %v314
    %v378 = vpop.f32.mrf.mxu0
    %v379 = vadd.f32 %v265, %v378
    %380 = vmatmul.f32.gmra.mxu0 %v317
    %v381 = vpop.f32.mrf.mxu0
    %v382 = vadd.f32 %v268, %v381
    %383 = vmatmul.f32.gmra.mxu0 %v320
    %v384 = vpop.f32.mrf.mxu0
    %v385 = vadd.f32 %v271, %v384
    %386 = vmatmul.f32.gmra.mxu0 %v323
    %v387 = vpop.f32.mrf.mxu0
    %v388 = vadd.f32 %v274, %v387
    %389 = vmatmul.f32.gmra.mxu0 %v326
    %v390 = vpop.f32.mrf.mxu0
    %v391 = vadd.f32 %v277, %v390
    %392 = vmatmul.f32.gmra.mxu0 %v329
    %v393 = vpop.f32.mrf.mxu0
    %v394 = vadd.f32 %v280, %v393
    %395 = vmatmul.f32.gmra.mxu0 %v332
    %v396 = vpop.f32.mrf.mxu0
    %v397 = vadd.f32 %v283, %v396
    %398 = vmatmul.f32.gmra.mxu0 %v335
    %v399 = vpop.f32.mrf.mxu0
    %v400 = vadd.f32 %v286, %v399
    %401 = vdwg.mxu0
    %v402 = vld [vmem:[%s5] sm:$0x1]
    %v404 = vperm.slane %v402, 0
    %v406 = vadd.f32 %v355, %v404
    %v407 = vadd.f32 %v358, %v404
    %v408 = vadd.f32 %v361, %v404
    %v409 = vadd.f32 %v364, %v404
    %v410 = vadd.f32 %v367, %v404
    %v411 = vadd.f32 %v370, %v404
    %v412 = vadd.f32 %v373, %v404
    %v413 = vadd.f32 %v376, %v404
    %v414 = vadd.f32 %v379, %v404
    %v415 = vadd.f32 %v382, %v404
    %v416 = vadd.f32 %v385, %v404
    %v417 = vadd.f32 %v388, %v404
    %v418 = vadd.f32 %v391, %v404
    %v419 = vadd.f32 %v394, %v404
    %v420 = vadd.f32 %v397, %v404
    %v421 = vadd.f32 %v400, %v404
    %422 = vst [vmem:[#allocation2] sm:$0xff] %v406
    %423 = vst [vmem:[#allocation2 + $0x8] sm:$0xff] %v407
    %424 = vst [vmem:[#allocation2 + $0x10] sm:$0xff] %v408
    %425 = vst [vmem:[#allocation2 + $0x18] sm:$0xff] %v409
    %426 = vst [vmem:[#allocation2 + $0x20] sm:$0xff] %v410
    %427 = vst [vmem:[#allocation2 + $0x28] sm:$0xff] %v411
    %428 = vst [vmem:[#allocation2 + $0x30] sm:$0xff] %v412
    %429 = vst [vmem:[#allocation2 + $0x38] sm:$0xff] %v413
    %430 = vst [vmem:[#allocation2 + $0x40] sm:$0xff] %v414
    %431 = vst [vmem:[#allocation2 + $0x48] sm:$0xff] %v415
    %432 = vst [vmem:[#allocation2 + $0x50] sm:$0xff] %v416
    %433 = vst [vmem:[#allocation2 + $0x58] sm:$0xff] %v417
    %434 = vst [vmem:[#allocation2 + $0x60] sm:$0xff] %v418
    %435 = vst [vmem:[#allocation2 + $0x68] sm:$0xff] %v419
    %436 = vst [vmem:[#allocation2 + $0x70] sm:$0xff] %v420
    %437 = vst [vmem:[#allocation2 + $0x78] sm:$0xff] %v421
    // Predicated region
    $region26: #{tpu_custom_call.1} parent=1 // pred_check
      _
    $region27: #{tpu_custom_call.1} parent=1 // pred_check_branch
      %439 = sbr.rel (0) target = $region29
    $region28: #{tpu_custom_call.1} parent=1 // pred_region
      %441 = vsyncadd [#allocation3], 0
      %s442 = sshll.u32 [#allocation2], 4
      %s443 = int_to_ptr.vmem [resolvable:$true] %s442
      %s444 = sshll.u32 %s6, 4
      %s445 = int_to_ptr.hbm [resolvable:$true] %s444
      %450 = dma.vmem_to_hbm [thread:$0]  %s443, 2048, %s445, [#allocation3], 128, 128, 8
    $region29: #{tpu_custom_call.1} parent=1 // pred_fallthru
      _
    // Predicated region
    $region30: #{tpu_custom_call.1} parent=1 // pred_check
      _
    $region31: #{tpu_custom_call.1} parent=1 // pred_check_branch
      %452 = sbr.rel (0) target = $region33
    $region32: #{tpu_custom_call.1} parent=1 // pred_region
      %454 = dma.done [#allocation3], 2048
    $region33: #{tpu_custom_call.1} parent=1 // pred_fallthru
      _
    %455 = vsyncpa [#allocation3], 1

</llo_original>
